<compile_context>
chip_gen: v7x
topology: tpu7x:2x2x1
jax: 0.10.0
libtpu: 0.0.40
codegen_flags: <defaults>
</compile_context>

<pallas_src>
import functools
import math

import jax
import jax.numpy as jnp
from jax.experimental import pallas as pl
from jax.experimental.pallas import tpu as pltpu


def _round_up(x, m):
    return -(-x // m) * m


def _time_aware_kernel(pos_ref, m_ref, out_ref, *, use_mxu):
    """pos_ref: (tile_r, P) grouped positions.
    m_ref:   (P, lane_w) block-diagonal weight/expansion matrix  (use_mxu=True)
             (1, d)      plain weight row                        (use_mxu=False)
    out_ref: (tile_r, lane_w) packed cos(pos * w)."""
    pos = pos_ref[...].astype(jnp.float32)
    m = m_ref[...].astype(jnp.float32)
    if use_mxu:
        # Expansion + multiply on the idle MXU.  E is block-diagonal (one
        # nonzero per column) so each output element is exactly pos * w[j];
        # HIGHEST keeps the phase at ~f32 accuracy before the cos.
        arg = jnp.dot(pos, m, preferred_element_type=jnp.float32,
                      precision=jax.lax.Precision.HIGHEST)
    else:
        # P == 1 (d % 128 == 0, or oversized-E fallback): lane-broadcast pos
        # against sublane-broadcast w on the VPU.
        arg = pos * m
    # jnp.cos lowers to a VPU polynomial (no EUP cos), so keeping the expansion
    # off the VALU (above) matters for the small-d / large-P cases.
    out_ref[...] = jnp.cos(arg).astype(out_ref.dtype)


def time_aware_encoder(pos, aware_weights, *, out_dtype=jnp.float32,
                       min_pallas_elems=0,
                       vmem_budget_bytes=32 * 1024 * 1024,
                       min_grid_steps=4,
                       max_expansion_bytes=8 * 1024 * 1024):
    """pos: (seq,) float, aware_weights: (d_emb_dim, 1) -> (seq, d_emb_dim).

    out_dtype: use jnp.bfloat16 on inference paths that accept it (halves HBM
      write traffic for this store-bound op); default f32 matches PyTorch.
    min_pallas_elems: below this output-element count, emit a plain fused jnp
      expression instead (recommended ~1<<20 in production so XLA fuses the
      cos into its consumer).  Default 0 => always use the Pallas kernel.
    """
    seq = int(pos.shape[0])
    d = int(aware_weights.shape[0])

    pos_f = pos.astype(jnp.float32).reshape(seq)
    w_f = aware_weights.astype(jnp.float32).reshape(d)

    if seq * d < min_pallas_elems:
        return jnp.cos(pos_f[:, None] * w_f[None, :]).astype(out_dtype)

    # ---- lane-dense packing factor (any d) ----
    P = 128 // math.gcd(d, 128)
    lane_w = P * d
    if P > 1 and _round_up(P, 8) * _round_up(lane_w, 128) * 4 > max_expansion_bytes:
        # Very large d nearly coprime to 128: expansion matrix would be huge.
        # Fall back to unpacked layout (store efficiency d / round_up(d,128)).
        P, lane_w = 1, d

    itemsize = jnp.dtype(out_dtype).itemsize
    sub = 8 * max(1, 4 // itemsize)          # sublane multiple for out_dtype

    # ---- VMEM accounting with real (lane-padded) footprints ----
    m_rows = P if P > 1 else 1
    m_blk = _round_up(m_rows, 8) * _round_up(lane_w, 128) * 4
    per_row = _round_up(lane_w, 128) * itemsize + _round_up(P, 128) * 4
    avail = max(vmem_budget_bytes - 2 * m_blk, 2 * per_row * sub)
    tile_r_max = max(sub, (avail // (2 * per_row)) // sub * sub)

    rows = -(-seq // P)                      # packed rows
    if rows <= sub:
        tile_r = rows                        # single full-extent block (legal)
        rows_p = rows
    else:
        steps = max(min_grid_steps, -(-rows // tile_r_max))
        tile_r = min(tile_r_max, _round_up(-(-rows // steps), sub))
        tile_r = max(sub, tile_r)
        if rows % tile_r != 0:
            # Prefer a nearby tile_r that divides rows exactly: avoids output
            # row padding and the post-kernel tail-slice copy, while keeping
            # >= 2 grid steps (hi <= 2*tile_r ~ rows/(steps/2)).
            lo = max(sub, (tile_r // 2) // sub * sub)
            hi = (min(tile_r_max, 2 * tile_r, rows) // sub) * sub
            cand = hi
            while cand >= lo:
                if rows % cand == 0:
                    tile_r = cand
                    break
                cand -= sub
        rows_p = _round_up(rows, tile_r)
    grid = (rows_p // tile_r,)

    # ---- inputs ----
    seq_pack = rows_p * P
    pos_pad = pos_f if seq_pack == seq else jnp.pad(pos_f, (0, seq_pack - seq))
    pos_packed = pos_pad.reshape(rows_p, P)
    if P > 1:
        # Block-diagonal expansion matrix: E[p, p*d + j] = w[j].
        m_mat = (jnp.eye(P, dtype=jnp.float32)[:, :, None]
                 * w_f[None, None, :]).reshape(P, lane_w)
    else:
        m_mat = w_f.reshape(1, d)

    out_blk = _round_up(tile_r, sub) * _round_up(lane_w, 128) * itemsize
    pos_blk = _round_up(tile_r, 8) * _round_up(P, 128) * 4
    footprint = 2 * (out_blk + pos_blk + m_blk)          # double-buffered
    vmem_limit = int(min(max(footprint + (2 << 20), 4 << 20), 100 << 20))

    cost = pl.CostEstimate(
        flops=2 * seq * d,
        transcendentals=seq * d,
        bytes_accessed=rows_p * lane_w * itemsize + 4 * (seq_pack + m_rows * lane_w),
    )

    out_packed = pl.pallas_call(
        functools.partial(_time_aware_kernel, use_mxu=(P > 1)),
        out_shape=jax.ShapeDtypeStruct((rows_p, lane_w), out_dtype),
        grid=grid,
        in_specs=[
            pl.BlockSpec((tile_r, P), lambda i: (i, 0)),
            pl.BlockSpec((m_rows, lane_w), lambda i: (0, 0)),
        ],
        out_specs=pl.BlockSpec((tile_r, lane_w), lambda i: (i, 0)),
        compiler_params=pltpu.CompilerParams(
            dimension_semantics=("parallel",),
            vmem_limit_bytes=vmem_limit),
        cost_estimate=cost,
    )(pos_packed, m_mat)

    out = out_packed.reshape(rows_p * P, d)
    if rows_p * P != seq:
        # Tail-slice copy; only taken when seq % P != 0 or no divisor tile_r
        # exists near the target size.
        out = out[:seq]
    return out


def _reference(pos, aware_weights):
    # Mirrors the PyTorch forward: cos(aware_weights * pos).t()
    return jnp.cos(aware_weights.astype(jnp.float32)
                   * pos[None, :].astype(jnp.float32)).T


if __name__ == "__main__":
    key = jax.random.PRNGKey(0)
    k_w, k_p, k_p2, k_w3, k_p3, k_w4, k_p4 = jax.random.split(key, 7)

    # Tolerance note: MXU-path tests use atol=1e-3 to accommodate the
    # bf16-multipass phase rounding of the MXU expansion (expected ~1e-5 with
    # precision=HIGHEST); any packing/indexing bug would produce O(1) errors.

    # --- Test 1: module-consistent small shapes (d=32 -> P=4, MXU path, 1 block) ---
    d_emb_dim, seq = 32, 8
    aware_weights = jax.random.normal(k_w, (d_emb_dim, 1), dtype=jnp.float32)
    pos = jax.random.uniform(k_p, (seq,), dtype=jnp.float32, minval=0.0, maxval=10.0)
    out = jax.block_until_ready(time_aware_encoder(pos, aware_weights))
    ref = _reference(pos, aware_weights)
    assert out.shape == (seq, d_emb_dim)
    assert jnp.allclose(out, ref, atol=1e-3), "mismatch vs reference (test 1)"

    # --- Test 2: long seq, tiny VMEM budget -> multi-step grid + row-padding path ---
    seq2 = 1000
    pos2 = jax.random.uniform(k_p2, (seq2,), dtype=jnp.float32, minval=0.0, maxval=10.0)
    out2 = jax.block_until_ready(
        time_aware_encoder(pos2, aware_weights, vmem_budget_bytes=1 << 20))
    ref2 = _reference(pos2, aware_weights)
    assert out2.shape == (seq2, d_emb_dim)
    assert jnp.allclose(out2, ref2, atol=1e-3), "mismatch vs reference (test 2)"

    # --- Test 3: d=40 (does not divide 128) -> generalized packing P=16, lane_w=640 ---
    d3, seq3 = 40, 64
    aware_weights3 = jax.random.normal(k_w3, (d3, 1), dtype=jnp.float32)
    pos3 = jax.random.uniform(k_p3, (seq3,), dtype=jnp.float32, minval=0.0, maxval=10.0)
    out3 = jax.block_until_ready(time_aware_encoder(pos3, aware_weights3))
    ref3 = _reference(pos3, aware_weights3)
    assert out3.shape == (seq3, d3)
    assert jnp.allclose(out3, ref3, atol=1e-3), "mismatch vs reference (test 3)"

    # --- Test 4: d=128 (multiple of 128) -> P=1 VPU broadcast path, multi-step grid ---
    d4, seq4 = 128, 100
    aware_weights4 = jax.random.normal(k_w4, (d4, 1), dtype=jnp.float32)
    pos4 = jax.random.uniform(k_p4, (seq4,), dtype=jnp.float32, minval=0.0, maxval=10.0)
    out4 = jax.block_until_ready(
        time_aware_encoder(pos4, aware_weights4, vmem_budget_bytes=1 << 20))
    ref4 = _reference(pos4, aware_weights4)
    assert out4.shape == (seq4, d4)
    assert jnp.allclose(out4, ref4, atol=1e-5), "mismatch vs reference (test 4)"

    print("KERNEL_OK")
</pallas_src>

<mosaic_0001>
module attributes {stable_mosaic.version = 11 : i64} {
  func.func @_time_aware_kernel(%arg0: i32, %arg1: memref<2x4xf32, #tpu.memory_space<vmem>>, %arg2: memref<4x128xf32, #tpu.memory_space<vmem>>, %arg3: memref<2x128xf32, #tpu.memory_space<vmem>>) attributes {dimension_semantics = [#tpu.dimension_semantics<parallel>], iteration_bounds = array<i64: 1>, scalar_prefetch = 0 : i64, scratch_operands = 0 : i64, tpu.core_type = #tpu.core_type<tc>, window_params = [{transform_indices = @transform_0, window_bounds = array<i64: 2, 4>}, {pipeline_mode = #tpu.pipeline_mode<synchronous>, transform_indices = @transform_1, window_bounds = array<i64: 4, 128>}, {transform_indices = @transform_2, window_bounds = array<i64: 2, 128>}]} {
    %c0 = arith.constant 0 : index
    %c0_0 = arith.constant 0 : index
    %0 = vector.load %arg1[%c0, %c0_0] : memref<2x4xf32, #tpu.memory_space<vmem>>, vector<2x4xf32>
    %c0_1 = arith.constant 0 : index
    %c0_2 = arith.constant 0 : index
    %1 = vector.load %arg2[%c0_1, %c0_2] : memref<4x128xf32, #tpu.memory_space<vmem>>, vector<4x128xf32>
    %cst = arith.constant dense<0.000000e+00> : vector<2x128xf32>
    %2 = tpu.matmul %0, %1, %cst {dimension_numbers = #tpu.dot_dimension_numbers<[1], [0], [0], [1], [0, 0, 1, 1], [], []>, precision = #tpu.contract_precision<fp32>} : vector<2x4xf32>, vector<4x128xf32>, vector<2x128xf32> -> vector<2x128xf32>
    %3 = math.cos %2 : vector<2x128xf32>
    %c0_3 = arith.constant 0 : index
    %c0_4 = arith.constant 0 : index
    %4 = vector.load %arg3[%c0_3, %c0_4] : memref<2x128xf32, #tpu.memory_space<vmem>>, vector<2x128xf32>
    tpu.vector_store %arg3[%c0_3, %c0_4], %3 {strides = array<i32>} : memref<2x128xf32, #tpu.memory_space<vmem>>, vector<2x128xf32>,
    return
  }
  func.func @transform_0(%arg0: i32) -> (i32, i32) {
    %c0_i32 = arith.constant 0 : i32
    %c0_i32_0 = arith.constant 0 : i32
    return %arg0, %c0_i32 : i32, i32
  }
  func.func @transform_1(%arg0: i32) -> (i32, i32) {
    %c0_i32 = arith.constant 0 : i32
    %c0_i32_0 = arith.constant 0 : i32
    %c0_i32_1 = arith.constant 0 : i32
    return %c0_i32, %c0_i32_0 : i32, i32
  }
  func.func @transform_2(%arg0: i32) -> (i32, i32) {
    %c0_i32 = arith.constant 0 : i32
    %c0_i32_0 = arith.constant 0 : i32
    return %arg0, %c0_i32 : i32, i32
  }
}

</mosaic_0001>

<llo_original>
// kernel: tpu_custom_call.1
$region0: #{tpu_custom_call.1}
  #allocation0 [shape = 'u32[]', space=smem, size = 0x4, offset = 0x4, fixed_abs, tag = 'smem constant byte address 0x4 - core index']
  #allocation1 [shape = 'u32[144,128]{1,0:T(1,128)}', space=vmem, size = 0x12000, scoped, tag = 'internal scratch']
  %s0 = inlined_call_operand.hbm [shape: f32[2,4], index: 0, kind: input, shape index: {}]
  %s1 = inlined_call_operand.hbm [shape: f32[4,128], index: 1, kind: input, shape index: {}]
  %s2 = inlined_call_operand.hbm [shape: f32[2,128], index: 2, kind: output, shape index: {}]
  %s3 = sld [smem:[#allocation0]]
  $region26: #{tpu_custom_call.1} parent=0
    _
  %s5 = ssub.s32 1, %s3
  %s6 = scalar_select 0, %s5, %s3
  $region1: #{tpu_custom_call.1} parent=0
    #allocation2 [shape = 'u8[1024]{0}', space=vmem, size = 0x400, scoped, tag = 'input window, operand 0, single buffered']
    #allocation3 [shape = 's32[1]{0}', space=sflag, size = 0x4, scoped, tag = 'scoped memory for tpu_custom_call.1']
    #allocation4 [shape = 's32[1]{0}', space=sflag, size = 0x4, scoped, tag = 'scoped memory for tpu_custom_call.1']
    #allocation5 [shape = 'u8[2048]{0}', space=vmem, size = 0x800, scoped, tag = 'input window, operand 1, single buffered']
    #allocation6 [shape = 's32[1]{0}', space=sflag, size = 0x4, scoped, tag = 'scoped memory for tpu_custom_call.1']
    #allocation7 [shape = 'u8[1024]{0}', space=vmem, size = 0x400, scoped, tag = 'output window, operand 0, single buffered']
    %7 = vsyncpa [#allocation3], 0
    %8 = vsyncpa [#allocation6], 0
    %9 = vsyncpa [#allocation4], 0
    // Predicated region
    $region2: #{tpu_custom_call.1} parent=1 // pred_check
      _
    $region3: #{tpu_custom_call.1} parent=1 // pred_check_branch
      %11 = sbr.rel (0) target = $region5
    $region4: #{tpu_custom_call.1} parent=1 // pred_region
      %s13 = ssub.s32 32, 32
      %14 = vsyncadd [#allocation3], %s13
      %s16 = sshll.u32 [#allocation2], 4
      %s17 = int_to_ptr.vmem [resolvable:$true] %s16
      %19 = dma.hbm_to_vmem [thread:$0]  %s0, 32, %s17, [#allocation3]
    $region5: #{tpu_custom_call.1} parent=1 // pred_fallthru
      _
    // Predicated region
    $region6: #{tpu_custom_call.1} parent=1 // pred_check
      _
    $region7: #{tpu_custom_call.1} parent=1 // pred_check_branch
      %21 = sbr.rel (0) target = $region9
    $region8: #{tpu_custom_call.1} parent=1 // pred_region
      %s23 = ssub.s32 64, 64
      %24 = vsyncadd [#allocation6], %s23
      %s26 = sshll.u32 [#allocation5], 4
      %s27 = int_to_ptr.vmem [resolvable:$true] %s26
      %29 = dma.hbm_to_vmem [thread:$0]  %s1, 64, %s27, [#allocation6]
    $region9: #{tpu_custom_call.1} parent=1 // pred_fallthru
      _
    // Predicated region
    $region10: #{tpu_custom_call.1} parent=1 // pred_check
      _
    $region11: #{tpu_custom_call.1} parent=1 // pred_check_branch
      %31 = sbr.rel (0) target = $region13
    $region12: #{tpu_custom_call.1} parent=1 // pred_region
      %32 = dma.done [#allocation3], 32
    $region13: #{tpu_custom_call.1} parent=1 // pred_fallthru
      _
    // Predicated region
    $region14: #{tpu_custom_call.1} parent=1 // pred_check
      _
    $region15: #{tpu_custom_call.1} parent=1 // pred_check_branch
      %34 = sbr.rel (0) target = $region17
    $region16: #{tpu_custom_call.1} parent=1 // pred_region
      %35 = dma.done [#allocation6], 64
    $region17: #{tpu_custom_call.1} parent=1 // pred_fallthru
      _
    %v36 = vld [vmem:[#allocation2] sm:$0x3]
    %v37 = vld [vmem:[#allocation5] sm:$0xf]
    %vm38 = vcmask 31744
    %v40 = vsel %vm38, %v36, 0
    %vm42 = vcmask 1043456
    %v44 = vsel %vm42, %v37, 0
    %46 = vmatprep.subr.mxu0 0.0
    %v47 = vand.u32 %v44, 4294901760
    %48 = vmatpush1.msra.mxu0 %v47
    %49 = vmatprep.subr.mxu0 0.0
    %50 = vmatpush1.msra.mxu0 0.0
    %51 = vmatprep.subr.mxu0 0.0
    %52 = vmatpush1.msra.mxu0 0.0
    %53 = vmatprep.subr.mxu0 0.0
    %54 = vmatpush1.msra.mxu0 0.0
    %55 = vmatprep.subr.mxu0 0.0
    %56 = vmatpush1.msra.mxu0 0.0
    %57 = vmatprep.subr.mxu0 0.0
    %58 = vmatpush1.msra.mxu0 0.0
    %59 = vmatprep.subr.mxu0 0.0
    %60 = vmatpush1.msra.mxu0 0.0
    %61 = vmatprep.subr.mxu0 0.0
    %62 = vmatpush1.msra.mxu0 0.0
    %63 = vmatprep.subr.mxu0 0.0
    %64 = vmatpush1.msra.mxu0 0.0
    %65 = vmatprep.subr.mxu0 0.0
    %66 = vmatpush1.msra.mxu0 0.0
    %67 = vmatprep.subr.mxu0 0.0
    %68 = vmatpush1.msra.mxu0 0.0
    %69 = vmatprep.subr.mxu0 0.0
    %70 = vmatpush1.msra.mxu0 0.0
    %71 = vmatprep.subr.mxu0 0.0
    %72 = vmatpush1.msra.mxu0 0.0
    %73 = vmatprep.subr.mxu0 0.0
    %74 = vmatpush1.msra.mxu0 0.0
    %75 = vmatprep.subr.mxu0 0.0
    %76 = vmatpush1.msra.mxu0 0.0
    %77 = vmatprep.subr.mxu0 0.0
    %78 = vmatpush1.msra.mxu0 0.0
    %79 = vmatprep.subr.mxu0 0.0
    %80 = vmatpush1.msra.mxu0 0.0
    %81 = vmatprep.subr.mxu0 0.0
    %82 = vmatpush1.msra.mxu0 0.0
    %83 = vmatprep.subr.mxu0 0.0
    %84 = vmatpush1.msra.mxu0 0.0
    %85 = vmatprep.subr.mxu0 0.0
    %86 = vmatpush1.msra.mxu0 0.0
    %87 = vmatprep.subr.mxu0 0.0
    %88 = vmatpush1.msra.mxu0 0.0
    %89 = vmatprep.subr.mxu0 0.0
    %90 = vmatpush1.msra.mxu0 0.0
    %91 = vmatprep.subr.mxu0 0.0
    %92 = vmatpush1.msra.mxu0 0.0
    %93 = vmatprep.subr.mxu0 0.0
    %94 = vmatpush1.msra.mxu0 0.0
    %95 = vmatprep.subr.mxu0 0.0
    %96 = vmatpush1.msra.mxu0 0.0
    %97 = vmatprep.subr.mxu0 0.0
    %98 = vmatpush1.msra.mxu0 0.0
    %99 = vmatprep.subr.mxu0 0.0
    %100 = vmatpush1.msra.mxu0 0.0
    %101 = vmatprep.subr.mxu0 0.0
    %102 = vmatpush1.msra.mxu0 0.0
    %103 = vmatprep.subr.mxu0 0.0
    %104 = vmatpush1.msra.mxu0 0.0
    %105 = vmatprep.subr.mxu0 0.0
    %106 = vmatpush1.msra.mxu0 0.0
    %107 = vmatprep.subr.mxu0 0.0
    %108 = vmatpush1.msra.mxu0 0.0
    %109 = vmatprep.subr.mxu0 0.0
    %110 = vmatpush1.msra.mxu0 0.0
    %111 = vmatprep.mubr.f32.mxu0 0.0
    %v112 = vand.u32 %v40, 4294901760
    %v113 = vsub.f32 %v40, %v112
    %v114 = vand.u32 %v113, 4294901760
    %v115 = vsub.f32 %v113, %v114
    %v116 = vand.u32 %v115, 4294901760
    %117 = vmatmul.mubr.f32.gmra.mrb[0].mxu0 %v116
    %v118 = vpop.f32.mrb[0].mxu0
    %v119 = vadd.f32 0.0, %v118
    %v120 = vpop.f32.mrb[0].mxu0
    %121 = vdwg.mxu0
    %122 = vmatprep.subr.mxu0 0.0
    %v123 = vand.u32 %v44, 4294901760
    %v124 = vsub.f32 %v44, %v123
    %v125 = vand.u32 %v124, 4294901760
    %v126 = vsub.f32 %v124, %v125
    %v127 = vand.u32 %v126, 4294901760
    %128 = vmatpush1.msra.mxu0 %v127
    %129 = vmatprep.subr.mxu0 0.0
    %130 = vmatpush1.msra.mxu0 0.0
    %131 = vmatprep.subr.mxu0 0.0
    %132 = vmatpush1.msra.mxu0 0.0
    %133 = vmatprep.subr.mxu0 0.0
    %134 = vmatpush1.msra.mxu0 0.0
    %135 = vmatprep.subr.mxu0 0.0
    %136 = vmatpush1.msra.mxu0 0.0
    %137 = vmatprep.subr.mxu0 0.0
    %138 = vmatpush1.msra.mxu0 0.0
    %139 = vmatprep.subr.mxu0 0.0
    %140 = vmatpush1.msra.mxu0 0.0
    %141 = vmatprep.subr.mxu0 0.0
    %142 = vmatpush1.msra.mxu0 0.0
    %143 = vmatprep.subr.mxu0 0.0
    %144 = vmatpush1.msra.mxu0 0.0
    %145 = vmatprep.subr.mxu0 0.0
    %146 = vmatpush1.msra.mxu0 0.0
    %147 = vmatprep.subr.mxu0 0.0
    %148 = vmatpush1.msra.mxu0 0.0
    %149 = vmatprep.subr.mxu0 0.0
    %150 = vmatpush1.msra.mxu0 0.0
    %151 = vmatprep.subr.mxu0 0.0
    %152 = vmatpush1.msra.mxu0 0.0
    %153 = vmatprep.subr.mxu0 0.0
    %154 = vmatpush1.msra.mxu0 0.0
    %155 = vmatprep.subr.mxu0 0.0
    %156 = vmatpush1.msra.mxu0 0.0
    %157 = vmatprep.subr.mxu0 0.0
    %158 = vmatpush1.msra.mxu0 0.0
    %159 = vmatprep.subr.mxu0 0.0
    %160 = vmatpush1.msra.mxu0 0.0
    %161 = vmatprep.subr.mxu0 0.0
    %162 = vmatpush1.msra.mxu0 0.0
    %163 = vmatprep.subr.mxu0 0.0
    %164 = vmatpush1.msra.mxu0 0.0
    %165 = vmatprep.subr.mxu0 0.0
    %166 = vmatpush1.msra.mxu0 0.0
    %167 = vmatprep.subr.mxu0 0.0
    %168 = vmatpush1.msra.mxu0 0.0
    %169 = vmatprep.subr.mxu0 0.0
    %170 = vmatpush1.msra.mxu0 0.0
    %171 = vmatprep.subr.mxu0 0.0
    %172 = vmatpush1.msra.mxu0 0.0
    %173 = vmatprep.subr.mxu0 0.0
    %174 = vmatpush1.msra.mxu0 0.0
    %175 = vmatprep.subr.mxu0 0.0
    %176 = vmatpush1.msra.mxu0 0.0
    %177 = vmatprep.subr.mxu0 0.0
    %178 = vmatpush1.msra.mxu0 0.0
    %179 = vmatprep.subr.mxu0 0.0
    %180 = vmatpush1.msra.mxu0 0.0
    %181 = vmatprep.subr.mxu0 0.0
    %182 = vmatpush1.msra.mxu0 0.0
    %183 = vmatprep.subr.mxu0 0.0
    %184 = vmatpush1.msra.mxu0 0.0
    %185 = vmatprep.subr.mxu0 0.0
    %186 = vmatpush1.msra.mxu0 0.0
    %187 = vmatprep.subr.mxu0 0.0
    %188 = vmatpush1.msra.mxu0 0.0
    %189 = vmatprep.subr.mxu0 0.0
    %190 = vmatpush1.msra.mxu0 0.0
    %191 = vmatprep.mubr.f32.mxu0 0.0
    %v192 = vand.u32 %v40, 4294901760
    %193 = vmatmul.mubr.f32.gmra.mrb[0].mxu0 %v192
    %v194 = vpop.f32.mrb[0].mxu0
    %v195 = vadd.f32 %v119, %v194
    %v196 = vpop.f32.mrb[0].mxu0
    %197 = vdwg.mxu0
    %198 = vmatprep.subr.mxu0 0.0
    %v199 = vand.u32 %v44, 4294901760
    %v200 = vsub.f32 %v44, %v199
    %201 = vmatpush1.msra.mxu0 %v200
    %202 = vmatprep.subr.mxu0 0.0
    %203 = vmatpush1.msra.mxu0 0.0
    %204 = vmatprep.subr.mxu0 0.0
    %205 = vmatpush1.msra.mxu0 0.0
    %206 = vmatprep.subr.mxu0 0.0
    %207 = vmatpush1.msra.mxu0 0.0
    %208 = vmatprep.subr.mxu0 0.0
    %209 = vmatpush1.msra.mxu0 0.0
    %210 = vmatprep.subr.mxu0 0.0
    %211 = vmatpush1.msra.mxu0 0.0
    %212 = vmatprep.subr.mxu0 0.0
    %213 = vmatpush1.msra.mxu0 0.0
    %214 = vmatprep.subr.mxu0 0.0
    %215 = vmatpush1.msra.mxu0 0.0
    %216 = vmatprep.subr.mxu0 0.0
    %217 = vmatpush1.msra.mxu0 0.0
    %218 = vmatprep.subr.mxu0 0.0
    %219 = vmatpush1.msra.mxu0 0.0
    %220 = vmatprep.subr.mxu0 0.0
    %221 = vmatpush1.msra.mxu0 0.0
    %222 = vmatprep.subr.mxu0 0.0
    %223 = vmatpush1.msra.mxu0 0.0
    %224 = vmatprep.subr.mxu0 0.0
    %225 = vmatpush1.msra.mxu0 0.0
    %226 = vmatprep.subr.mxu0 0.0
    %227 = vmatpush1.msra.mxu0 0.0
    %228 = vmatprep.subr.mxu0 0.0
    %229 = vmatpush1.msra.mxu0 0.0
    %230 = vmatprep.subr.mxu0 0.0
    %231 = vmatpush1.msra.mxu0 0.0
    %232 = vmatprep.subr.mxu0 0.0
    %233 = vmatpush1.msra.mxu0 0.0
    %234 = vmatprep.subr.mxu0 0.0
    %235 = vmatpush1.msra.mxu0 0.0
    %236 = vmatprep.subr.mxu0 0.0
    %237 = vmatpush1.msra.mxu0 0.0
    %238 = vmatprep.subr.mxu0 0.0
    %239 = vmatpush1.msra.mxu0 0.0
    %240 = vmatprep.subr.mxu0 0.0
    %241 = vmatpush1.msra.mxu0 0.0
    %242 = vmatprep.subr.mxu0 0.0
    %243 = vmatpush1.msra.mxu0 0.0
    %244 = vmatprep.subr.mxu0 0.0
    %245 = vmatpush1.msra.mxu0 0.0
    %246 = vmatprep.subr.mxu0 0.0
    %247 = vmatpush1.msra.mxu0 0.0
    %248 = vmatprep.subr.mxu0 0.0
    %249 = vmatpush1.msra.mxu0 0.0
    %250 = vmatprep.subr.mxu0 0.0
    %251 = vmatpush1.msra.mxu0 0.0
    %252 = vmatprep.subr.mxu0 0.0
    %253 = vmatpush1.msra.mxu0 0.0
    %254 = vmatprep.subr.mxu0 0.0
    %255 = vmatpush1.msra.mxu0 0.0
    %256 = vmatprep.subr.mxu0 0.0
    %257 = vmatpush1.msra.mxu0 0.0
    %258 = vmatprep.subr.mxu0 0.0
    %259 = vmatpush1.msra.mxu0 0.0
    %260 = vmatprep.subr.mxu0 0.0
    %261 = vmatpush1.msra.mxu0 0.0
    %262 = vmatprep.subr.mxu0 0.0
    %263 = vmatpush1.msra.mxu0 0.0
    %264 = vmatprep.mubr.f32.mxu0 0.0
    %v265 = vand.u32 %v40, 4294901760
    %v266 = vsub.f32 %v40, %v265
    %267 = vmatmul.mubr.f32.gmra.mrb[0].mxu0 %v266
    %v268 = vpop.f32.mrb[0].mxu0
    %v269 = vadd.f32 %v195, %v268
    %v270 = vpop.f32.mrb[0].mxu0
    %271 = vdwg.mxu0
    %272 = vmatprep.subr.mxu0 0.0
    %v273 = vand.u32 %v44, 4294901760
    %274 = vmatpush1.msra.mxu0 %v273
    %275 = vmatprep.subr.mxu0 0.0
    %276 = vmatpush1.msra.mxu0 0.0
    %277 = vmatprep.subr.mxu0 0.0
    %278 = vmatpush1.msra.mxu0 0.0
    %279 = vmatprep.subr.mxu0 0.0
    %280 = vmatpush1.msra.mxu0 0.0
    %281 = vmatprep.subr.mxu0 0.0
    %282 = vmatpush1.msra.mxu0 0.0
    %283 = vmatprep.subr.mxu0 0.0
    %284 = vmatpush1.msra.mxu0 0.0
    %285 = vmatprep.subr.mxu0 0.0
    %286 = vmatpush1.msra.mxu0 0.0
    %287 = vmatprep.subr.mxu0 0.0
    %288 = vmatpush1.msra.mxu0 0.0
    %289 = vmatprep.subr.mxu0 0.0
    %290 = vmatpush1.msra.mxu0 0.0
    %291 = vmatprep.subr.mxu0 0.0
    %292 = vmatpush1.msra.mxu0 0.0
    %293 = vmatprep.subr.mxu0 0.0
    %294 = vmatpush1.msra.mxu0 0.0
    %295 = vmatprep.subr.mxu0 0.0
    %296 = vmatpush1.msra.mxu0 0.0
    %297 = vmatprep.subr.mxu0 0.0
    %298 = vmatpush1.msra.mxu0 0.0
    %299 = vmatprep.subr.mxu0 0.0
    %300 = vmatpush1.msra.mxu0 0.0
    %301 = vmatprep.subr.mxu0 0.0
    %302 = vmatpush1.msra.mxu0 0.0
    %303 = vmatprep.subr.mxu0 0.0
    %304 = vmatpush1.msra.mxu0 0.0
    %305 = vmatprep.subr.mxu0 0.0
    %306 = vmatpush1.msra.mxu0 0.0
    %307 = vmatprep.subr.mxu0 0.0
    %308 = vmatpush1.msra.mxu0 0.0
    %309 = vmatprep.subr.mxu0 0.0
    %310 = vmatpush1.msra.mxu0 0.0
    %311 = vmatprep.subr.mxu0 0.0
    %312 = vmatpush1.msra.mxu0 0.0
    %313 = vmatprep.subr.mxu0 0.0
    %314 = vmatpush1.msra.mxu0 0.0
    %315 = vmatprep.subr.mxu0 0.0
    %316 = vmatpush1.msra.mxu0 0.0
    %317 = vmatprep.subr.mxu0 0.0
    %318 = vmatpush1.msra.mxu0 0.0
    %319 = vmatprep.subr.mxu0 0.0
    %320 = vmatpush1.msra.mxu0 0.0
    %321 = vmatprep.subr.mxu0 0.0
    %322 = vmatpush1.msra.mxu0 0.0
    %323 = vmatprep.subr.mxu0 0.0
    %324 = vmatpush1.msra.mxu0 0.0
    %325 = vmatprep.subr.mxu0 0.0
    %326 = vmatpush1.msra.mxu0 0.0
    %327 = vmatprep.subr.mxu0 0.0
    %328 = vmatpush1.msra.mxu0 0.0
    %329 = vmatprep.subr.mxu0 0.0
    %330 = vmatpush1.msra.mxu0 0.0
    %331 = vmatprep.subr.mxu0 0.0
    %332 = vmatpush1.msra.mxu0 0.0
    %333 = vmatprep.subr.mxu0 0.0
    %334 = vmatpush1.msra.mxu0 0.0
    %335 = vmatprep.subr.mxu0 0.0
    %336 = vmatpush1.msra.mxu0 0.0
    %337 = vmatprep.mubr.f32.mxu0 0.0
    %v338 = vand.u32 %v40, 4294901760
    %v339 = vsub.f32 %v40, %v338
    %v340 = vand.u32 %v339, 4294901760
    %341 = vmatmul.mubr.f32.gmra.mrb[0].mxu0 %v340
    %v342 = vpop.f32.mrb[0].mxu0
    %v343 = vadd.f32 %v269, %v342
    %v344 = vpop.f32.mrb[0].mxu0
    %345 = vdwg.mxu0
    %346 = vmatprep.subr.mxu0 0.0
    %v347 = vand.u32 %v44, 4294901760
    %v348 = vsub.f32 %v44, %v347
    %v349 = vand.u32 %v348, 4294901760
    %350 = vmatpush1.msra.mxu0 %v349
    %351 = vmatprep.subr.mxu0 0.0
    %352 = vmatpush1.msra.mxu0 0.0
    %353 = vmatprep.subr.mxu0 0.0
    %354 = vmatpush1.msra.mxu0 0.0
    %355 = vmatprep.subr.mxu0 0.0
    %356 = vmatpush1.msra.mxu0 0.0
    %357 = vmatprep.subr.mxu0 0.0
    %358 = vmatpush1.msra.mxu0 0.0
    %359 = vmatprep.subr.mxu0 0.0
    %360 = vmatpush1.msra.mxu0 0.0
    %361 = vmatprep.subr.mxu0 0.0
    %362 = vmatpush1.msra.mxu0 0.0
    %363 = vmatprep.subr.mxu0 0.0
    %364 = vmatpush1.msra.mxu0 0.0
    %365 = vmatprep.subr.mxu0 0.0
    %366 = vmatpush1.msra.mxu0 0.0
    %367 = vmatprep.subr.mxu0 0.0
    %368 = vmatpush1.msra.mxu0 0.0
    %369 = vmatprep.subr.mxu0 0.0
    %370 = vmatpush1.msra.mxu0 0.0
    %371 = vmatprep.subr.mxu0 0.0
    %372 = vmatpush1.msra.mxu0 0.0
    %373 = vmatprep.subr.mxu0 0.0
    %374 = vmatpush1.msra.mxu0 0.0
    %375 = vmatprep.subr.mxu0 0.0
    %376 = vmatpush1.msra.mxu0 0.0
    %377 = vmatprep.subr.mxu0 0.0
    %378 = vmatpush1.msra.mxu0 0.0
    %379 = vmatprep.subr.mxu0 0.0
    %380 = vmatpush1.msra.mxu0 0.0
    %381 = vmatprep.subr.mxu0 0.0
    %382 = vmatpush1.msra.mxu0 0.0
    %383 = vmatprep.subr.mxu0 0.0
    %384 = vmatpush1.msra.mxu0 0.0
    %385 = vmatprep.subr.mxu0 0.0
    %386 = vmatpush1.msra.mxu0 0.0
    %387 = vmatprep.subr.mxu0 0.0
    %388 = vmatpush1.msra.mxu0 0.0
    %389 = vmatprep.subr.mxu0 0.0
    %390 = vmatpush1.msra.mxu0 0.0
    %391 = vmatprep.subr.mxu0 0.0
    %392 = vmatpush1.msra.mxu0 0.0
    %393 = vmatprep.subr.mxu0 0.0
    %394 = vmatpush1.msra.mxu0 0.0
    %395 = vmatprep.subr.mxu0 0.0
    %396 = vmatpush1.msra.mxu0 0.0
    %397 = vmatprep.subr.mxu0 0.0
    %398 = vmatpush1.msra.mxu0 0.0
    %399 = vmatprep.subr.mxu0 0.0
    %400 = vmatpush1.msra.mxu0 0.0
    %401 = vmatprep.subr.mxu0 0.0
    %402 = vmatpush1.msra.mxu0 0.0
    %403 = vmatprep.subr.mxu0 0.0
    %404 = vmatpush1.msra.mxu0 0.0
    %405 = vmatprep.subr.mxu0 0.0
    %406 = vmatpush1.msra.mxu0 0.0
    %407 = vmatprep.subr.mxu0 0.0
    %408 = vmatpush1.msra.mxu0 0.0
    %409 = vmatprep.subr.mxu0 0.0
    %410 = vmatpush1.msra.mxu0 0.0
    %411 = vmatprep.subr.mxu0 0.0
    %412 = vmatpush1.msra.mxu0 0.0
    %413 = vmatprep.mubr.f32.mxu0 0.0
    %v414 = vand.u32 %v40, 4294901760
    %415 = vmatmul.mubr.f32.gmra.mrb[0].mxu0 %v414
    %v416 = vpop.f32.mrb[0].mxu0
    %v417 = vadd.f32 %v343, %v416
    %v418 = vpop.f32.mrb[0].mxu0
    %419 = vdwg.mxu0
    %420 = vmatprep.subr.mxu0 0.0
    %v421 = vand.u32 %v44, 4294901760
    %422 = vmatpush1.msra.mxu0 %v421
    %423 = vmatprep.subr.mxu0 0.0
    %424 = vmatpush1.msra.mxu0 0.0
    %425 = vmatprep.subr.mxu0 0.0
    %426 = vmatpush1.msra.mxu0 0.0
    %427 = vmatprep.subr.mxu0 0.0
    %428 = vmatpush1.msra.mxu0 0.0
    %429 = vmatprep.subr.mxu0 0.0
    %430 = vmatpush1.msra.mxu0 0.0
    %431 = vmatprep.subr.mxu0 0.0
    %432 = vmatpush1.msra.mxu0 0.0
    %433 = vmatprep.subr.mxu0 0.0
    %434 = vmatpush1.msra.mxu0 0.0
    %435 = vmatprep.subr.mxu0 0.0
    %436 = vmatpush1.msra.mxu0 0.0
    %437 = vmatprep.subr.mxu0 0.0
    %438 = vmatpush1.msra.mxu0 0.0
    %439 = vmatprep.subr.mxu0 0.0
    %440 = vmatpush1.msra.mxu0 0.0
    %441 = vmatprep.subr.mxu0 0.0
    %442 = vmatpush1.msra.mxu0 0.0
    %443 = vmatprep.subr.mxu0 0.0
    %444 = vmatpush1.msra.mxu0 0.0
    %445 = vmatprep.subr.mxu0 0.0
    %446 = vmatpush1.msra.mxu0 0.0
    %447 = vmatprep.subr.mxu0 0.0
    %448 = vmatpush1.msra.mxu0 0.0
    %449 = vmatprep.subr.mxu0 0.0
    %450 = vmatpush1.msra.mxu0 0.0
    %451 = vmatprep.subr.mxu0 0.0
    %452 = vmatpush1.msra.mxu0 0.0
    %453 = vmatprep.subr.mxu0 0.0
    %454 = vmatpush1.msra.mxu0 0.0
    %455 = vmatprep.subr.mxu0 0.0
    %456 = vmatpush1.msra.mxu0 0.0
    %457 = vmatprep.subr.mxu0 0.0
    %458 = vmatpush1.msra.mxu0 0.0
    %459 = vmatprep.subr.mxu0 0.0
    %460 = vmatpush1.msra.mxu0 0.0
    %461 = vmatprep.subr.mxu0 0.0
    %462 = vmatpush1.msra.mxu0 0.0
    %463 = vmatprep.subr.mxu0 0.0
    %464 = vmatpush1.msra.mxu0 0.0
    %465 = vmatprep.subr.mxu0 0.0
    %466 = vmatpush1.msra.mxu0 0.0
    %467 = vmatprep.subr.mxu0 0.0
    %468 = vmatpush1.msra.mxu0 0.0
    %469 = vmatprep.subr.mxu0 0.0
    %470 = vmatpush1.msra.mxu0 0.0
    %471 = vmatprep.subr.mxu0 0.0
    %472 = vmatpush1.msra.mxu0 0.0
    %473 = vmatprep.subr.mxu0 0.0
    %474 = vmatpush1.msra.mxu0 0.0
    %475 = vmatprep.subr.mxu0 0.0
    %476 = vmatpush1.msra.mxu0 0.0
    %477 = vmatprep.subr.mxu0 0.0
    %478 = vmatpush1.msra.mxu0 0.0
    %479 = vmatprep.subr.mxu0 0.0
    %480 = vmatpush1.msra.mxu0 0.0
    %481 = vmatprep.subr.mxu0 0.0
    %482 = vmatpush1.msra.mxu0 0.0
    %483 = vmatprep.subr.mxu0 0.0
    %484 = vmatpush1.msra.mxu0 0.0
    %485 = vmatprep.mubr.f32.mxu0 0.0
    %v486 = vand.u32 %v40, 4294901760
    %487 = vmatmul.mubr.f32.gmra.mrb[0].mxu0 %v486
    %v488 = vpop.f32.mrb[0].mxu0
    %v489 = vadd.f32 %v417, %v488
    %v490 = vpop.f32.mrb[0].mxu0
    %491 = vdwg.mxu0
    %v492 = vand.u32 2147483647, %v489
    %vm493 = vcmp.le.f32.partialorder %v492, 0.7853982
    %vm494 = vcmp.lt.s32.totalorder %v489, 0
    %v495 = vand.u32 %v489, 2139095040
    %v496 = vshrl.u32 %v495, 23
    %v497 = vsub.s32 %v496, 127
    %v498 = vand.u32 2147483647, %v489
    %v499 = vand.u32 %v498, 8388607
    %v500 = vor.u32 %v499, 8388608
    %v501 = vsub.s32 0, %v500
    %v502 = vadd.s32 %v497, 1
    %vm503 = vcmp.gt.s32.totalorder %v502, 0
    %v504 = vsel %vm503, %v502, 0
    %v505 = vshrl.u32 %v504, 5
    %v506 = vand.u32 %v504, 31
    %v507 = vsub.s32 32, %v506
    %v508 = vshrl.u32 683565275, %v507
    %v509 = vshll.u32 683565275, %v506
    %v510 = vshrl.u32 2475754826, %v507
    %v511 = vor.u32 %v509, %v510
    %v512 = vshll.u32 2475754826, %v506
    %v513 = vshrl.u32 2131351028, %v507
    %v514 = vor.u32 %v512, %v513
    %v515 = vshll.u32 2131351028, %v506
    %v516 = vshrl.u32 2102212464, %v507
    %v517 = vor.u32 %v515, %v516
    %v518 = vshll.u32 2102212464, %v506
    %v519 = vshrl.u32 920167782, %v507
    %v520 = vor.u32 %v518, %v519
    %v521 = vshll.u32 920167782, %v506
    %v522 = vshrl.u32 1326507024, %v507
    %v523 = vor.u32 %v521, %v522
    %vm524 = vcmp.lt.s32.totalorder %v505, 1
    %vm525 = vcmp.lt.s32.totalorder %v505, 2
    %vm526 = vcmp.lt.s32.totalorder %v505, 3
    %vm527 = vcmp.lt.s32.totalorder %v505, 4
    %v528 = vsel %vm524, %v508, %v511
    %v529 = vsel %vm527, %v517, 2102212464
    %v530 = vsel %vm526, %v514, %v529
    %v531 = vsel %vm525, %v528, %v530
    %v532 = vsel %vm524, %v511, %v514
    %v533 = vsel %vm527, %v520, 920167782
    %v534 = vsel %vm526, %v517, %v533
    %v535 = vsel %vm525, %v532, %v534
    %v536 = vsel %vm524, %v514, %v517
    %v537 = vsel %vm527, %v523, 1326507024
    %v538 = vsel %vm526, %v520, %v537
    %v539 = vsel %vm525, %v536, %v538
    %v540 = vshll.u32 %v500, 8
    %v541 = vmul.u32.u64.compose %v540, %v539
    %v542 = vextract.low.u32 %v541
    %v543 = vextract.high.u32 %v541
    %v544 = vmul.u32.u64.compose %v540, %v535
    %v545 = vextract.low.u32 %v544
    %v546 = vextract.high.u32 %v544
    %v547 = vmul.u32 %v540, %v531
    %v548 = vadd.s32 %v543, %v545
    %vm549 = vc.u32 %v543, %v545
    %v550 = vadd.s32 %v546, 1
    %v551 = vsel %vm549, %v550, %v546
    %v552 = vadd.s32 %v547, %v551
    %v553 = vadd.s32 %v552, 536870912
    %v554 = vshrl.u32 %v553, 30
    %v555 = vshll.u32 %v554, 30
    %v556 = vsub.s32 %v552, %v555
    %vm557 = vcmp.lt.s32.totalorder %v556, 0
    %v558 = vsub.s32 0, %v556
    %v559 = vsel %vm557, %v558, %v556
    %v560 = vclz %v559
    %v561 = vsub.s32 %v560, 2
    %vm562 = vcmp.gt.s32.totalorder 0, %v561
    %v563 = vsel %vm562, 0, %v561
    %v564 = vsub.s32 32, %v563
    %v565 = vshll.u32 %v556, %v563
    %v566 = vshrl.u32 %v548, %v564
    %v567 = vor.u32 %v565, %v566
    %v568 = vsub.s32 4294967266, %v563
    %v569 = vadd.s32 %v568, 127
    %v570 = vshll.u32 %v569, 23
    %v571 = vor.u32 4788187, %v570
    %v572 = vand.u32 2147483647, %v571
    %v574 = vcvt.s32.f32 %v567
    %v575 = vmul.f32 %v574, %v572
    %v576 = vxor.u32 %v575, 2147483648
    %v577 = vsel %vm494, %v576, %v575
    %v578 = vsub.s32 4, %v554
    %v579 = vsel %vm494, %v578, %v554
    %v580 = vsel %vm493, %v489, %v577
    %v581 = vsel %vm493, 0, %v579
    %v582 = vcosq.f32.pop %v580
    %v583 = vsinq.f32.pop %v580
    %vm584 = vweird.f32 %v489
    %v585 = vand.u32 %v581, 3
    %vm586 = vcmp.lt.s32.totalorder %v585, 2
    %vm587 = vcmp.eq.s32.totalorder %v585, 0
    %v588 = vxor.u32 %v583, 2147483648
    %v589 = vsel %vm587, %v582, %v588
    %vm590 = vcmp.eq.s32.totalorder %v585, 2
    %v591 = vxor.u32 %v582, 2147483648
    %v592 = vsel %vm590, %v591, %v583
    %v593 = vsel %vm586, %v589, %v592
    %v594 = vsel %vm584, nan, %v593
    %595 = vst [vmem:[#allocation7] sm:$0x3] %v594
    // Predicated region
    $region18: #{tpu_custom_call.1} parent=1 // pred_check
      _
    $region19: #{tpu_custom_call.1} parent=1 // pred_check_branch
      %597 = sbr.rel (0) target = $region21
    $region20: #{tpu_custom_call.1} parent=1 // pred_region
      %s599 = ssub.s32 32, 32
      %600 = vsyncadd [#allocation4], %s599
      %s602 = sshll.u32 [#allocation7], 4
      %s603 = int_to_ptr.vmem [resolvable:$true] %s602
      %605 = dma.vmem_to_hbm [thread:$0]  %s603, 32, %s2, [#allocation4]
    $region21: #{tpu_custom_call.1} parent=1 // pred_fallthru
      _
    // Predicated region
    $region22: #{tpu_custom_call.1} parent=1 // pred_check
      _
    $region23: #{tpu_custom_call.1} parent=1 // pred_check_branch
      %607 = sbr.rel (0) target = $region25
    $region24: #{tpu_custom_call.1} parent=1 // pred_region
      %608 = dma.done [#allocation4], 32
    $region25: #{tpu_custom_call.1} parent=1 // pred_fallthru
      _
    %609 = vsyncpa [#allocation3], 1
    %610 = vsyncpa [#allocation6], 1
    %611 = vsyncpa [#allocation4], 1

</llo_original>
